<compile_context>
chip_gen: v7x
topology: tpu7x:2x2x1
jax: 0.10.0
libtpu: 0.0.40
codegen_flags: <defaults>
</compile_context>

<pallas_src>
import jax
import jax.numpy as jnp
from jax.experimental import pallas as pl
from jax.experimental.pallas import tpu as pltpu


def critic_kernel(s_ref, a_ref,
                  w1s_ref, w1a_ref, b1_ref,
                  w2_ref, b2_ref,
                  w3_ref, b3_ref,
                  w4_ref, b4_ref,
                  o_ref):
    # Layer 1 with the concat fused into two MXU passes:
    #   [TB, Ds] @ [Ds, H] + [TB, Da] @ [Da, H] + b1 -> ReLU
    h = jnp.dot(s_ref[...], w1s_ref[...], preferred_element_type=jnp.float32)
    h = h + jnp.dot(a_ref[...], w1a_ref[...], preferred_element_type=jnp.float32)
    h = jnp.maximum(h + b1_ref[...], 0.0)
    # Layer 2
    h = jnp.dot(h, w2_ref[...], preferred_element_type=jnp.float32)
    h = jnp.maximum(h + b2_ref[...], 0.0)
    # Layer 3
    h = jnp.dot(h, w3_ref[...], preferred_element_type=jnp.float32)
    h = jnp.maximum(h + b3_ref[...], 0.0)
    # Output layer: [TB, H] @ [H, 1] + scalar bias (from SMEM, scalar path)
    out = jnp.dot(h, w4_ref[...], preferred_element_type=jnp.float32) + b4_ref[0, 0]
    o_ref[...] = out.astype(o_ref.dtype)


def _pick_batch_tile(batch):
    # Full batch fits comfortably in VMEM up to ~512 rows (weights are ~10 KB,
    # a 512 x D_in f32 tile is well under the 32 MiB scoped default even with
    # double buffering on v7x's 64 MiB VMEM). For larger batches tile at 512
    # rows (multiple of 8 -> satisfies the (8,128) sublane rule).
    return batch if batch <= 512 else 512


def critic_forward(state, action, params, *, tb=None):
    """state: [B, state_dim], action: [B, action_dim] -> [B, 1] (float32)."""
    B, Ds = state.shape
    _, Da = action.shape
    w1s, w1a, b1, w2, b2, w3, b3, w4, b4 = params
    H = w1s.shape[1]

    if tb is None:
        tb = _pick_batch_tile(B)
    grid = (pl.cdiv(B, tb),)

    batch_map = lambda i: (i, 0)   # state / action / output: advance along batch
    const_map = lambda i: (0, 0)   # weights & biases: resident in VMEM

    return pl.pallas_call(
        critic_kernel,
        out_shape=jax.ShapeDtypeStruct((B, 1), jnp.float32),
        grid_spec=pltpu.PrefetchScalarGridSpec(
            num_scalar_prefetch=0,
            grid=grid,
            in_specs=[
                pl.BlockSpec((tb, Ds), batch_map),   # state tile
                pl.BlockSpec((tb, Da), batch_map),   # action tile
                pl.BlockSpec((Ds, H), const_map),    # W1[:state_dim]
                pl.BlockSpec((Da, H), const_map),    # W1[state_dim:]
                pl.BlockSpec((1, H), const_map),     # b1
                pl.BlockSpec((H, H), const_map),     # W2
                pl.BlockSpec((1, H), const_map),     # b2
                pl.BlockSpec((H, H), const_map),     # W3
                pl.BlockSpec((1, H), const_map),     # b3
                pl.BlockSpec((H, 1), const_map),     # W4
                pl.BlockSpec(memory_space=pltpu.MemorySpace.SMEM),  # b4 scalar
            ],
            out_specs=pl.BlockSpec((tb, 1), batch_map),
        ),
        compiler_params=pltpu.CompilerParams(
            # Batch tiles are independent -> shard across both TCs on v7x.
            dimension_semantics=("parallel",)),
    )(state, action, w1s, w1a, b1, w2, b2, w3, b3, w4, b4)


def init_params(key, state_dim, action_dim, net_dim):
    """Deterministic synthetic params. Weights stored as [in, out]; W1 is
    pre-split into (state rows, action rows) so the concat is fused in-kernel."""
    d_in = state_dim + action_dim
    dims = [(d_in, net_dim), (net_dim, net_dim), (net_dim, net_dim), (net_dim, 1)]
    raw = []
    for fan_in, fan_out in dims:
        kw, kb, key = jax.random.split(key, 3)
        bound = 1.0 / jnp.sqrt(fan_in)  # matches nn.Linear default init range
        w = jax.random.uniform(kw, (fan_in, fan_out), jnp.float32, -bound, bound)
        b = jax.random.uniform(kb, (1, fan_out), jnp.float32, -bound, bound)
        raw += [w, b]
    w1, b1, w2, b2, w3, b3, w4, b4 = raw
    w1s, w1a = w1[:state_dim], w1[state_dim:]
    return (w1s, w1a, b1, w2, b2, w3, b3, w4, b4)


def critic_reference(state, action, params):
    w1s, w1a, b1, w2, b2, w3, b3, w4, b4 = params
    x = jnp.concatenate([state, action], axis=1)
    w1 = jnp.concatenate([w1s, w1a], axis=0)
    x = jnp.maximum(x @ w1 + b1, 0.0)
    x = jnp.maximum(x @ w2 + b2, 0.0)
    x = jnp.maximum(x @ w3 + b3, 0.0)
    return x @ w4 + b4


if __name__ == "__main__":
    B, state_dim, action_dim, net_dim = 8, 12, 4, 32

    key = jax.random.PRNGKey(0)
    k_s, k_a, k_p = jax.random.split(key, 3)
    state = jax.random.normal(k_s, (B, state_dim), jnp.float32)
    action = jax.random.normal(k_a, (B, action_dim), jnp.float32)
    params = init_params(k_p, state_dim, action_dim, net_dim)

    out = critic_forward(state, action, params)
    out = jax.block_until_ready(out)

    ref = critic_reference(state, action, params)
    assert out.shape == (B, 1)
    assert jnp.allclose(out, ref, atol=1e-5, rtol=1e-5), (out, ref)

    print("KERNEL_OK")
</pallas_src>

<mosaic_0001>
module attributes {stable_mosaic.version = 11 : i64} {
  func.func @critic_kernel(%arg0: i32, %arg1: memref<8x12xf32, #tpu.memory_space<vmem>>, %arg2: memref<8x4xf32, #tpu.memory_space<vmem>>, %arg3: memref<12x32xf32, #tpu.memory_space<vmem>>, %arg4: memref<4x32xf32, #tpu.memory_space<vmem>>, %arg5: memref<1x32xf32, #tpu.memory_space<vmem>>, %arg6: memref<32x32xf32, #tpu.memory_space<vmem>>, %arg7: memref<1x32xf32, #tpu.memory_space<vmem>>, %arg8: memref<32x32xf32, #tpu.memory_space<vmem>>, %arg9: memref<1x32xf32, #tpu.memory_space<vmem>>, %arg10: memref<32x1xf32, #tpu.memory_space<vmem>>, %arg11: memref<1x1xf32, #tpu.memory_space<smem>>, %arg12: memref<8x1xf32, #tpu.memory_space<vmem>>) attributes {dimension_semantics = [#tpu.dimension_semantics<parallel>], iteration_bounds = array<i64: 1>, scalar_prefetch = 0 : i64, scratch_operands = 0 : i64, tpu.core_type = #tpu.core_type<tc>, window_params = [{transform_indices = @transform_0, window_bounds = array<i64: 8, 12>}, {transform_indices = @transform_1, window_bounds = array<i64: 8, 4>}, {pipeline_mode = #tpu.pipeline_mode<synchronous>, transform_indices = @transform_2, window_bounds = array<i64: 12, 32>}, {pipeline_mode = #tpu.pipeline_mode<synchronous>, transform_indices = @transform_3, window_bounds = array<i64: 4, 32>}, {pipeline_mode = #tpu.pipeline_mode<synchronous>, transform_indices = @transform_4, window_bounds = array<i64: 1, 32>}, {pipeline_mode = #tpu.pipeline_mode<synchronous>, transform_indices = @transform_5, window_bounds = array<i64: 32, 32>}, {pipeline_mode = #tpu.pipeline_mode<synchronous>, transform_indices = @transform_6, window_bounds = array<i64: 1, 32>}, {pipeline_mode = #tpu.pipeline_mode<synchronous>, transform_indices = @transform_7, window_bounds = array<i64: 32, 32>}, {pipeline_mode = #tpu.pipeline_mode<synchronous>, transform_indices = @transform_8, window_bounds = array<i64: 1, 32>}, {pipeline_mode = #tpu.pipeline_mode<synchronous>, transform_indices = @transform_9, window_bounds = array<i64: 32, 1>}, {transform_indices = @transform_10, window_bounds = array<i64: 1, 1>}, {transform_indices = @transform_11, window_bounds = array<i64: 8, 1>}]} {
    %c0 = arith.constant 0 : index
    %c0_0 = arith.constant 0 : index
    %0 = vector.load %arg1[%c0, %c0_0] : memref<8x12xf32, #tpu.memory_space<vmem>>, vector<8x12xf32>
    %c0_1 = arith.constant 0 : index
    %c0_2 = arith.constant 0 : index
    %1 = vector.load %arg3[%c0_1, %c0_2] : memref<12x32xf32, #tpu.memory_space<vmem>>, vector<12x32xf32>
    %cst = arith.constant dense<0.000000e+00> : vector<8x32xf32>
    %2 = tpu.matmul %0, %1, %cst {dimension_numbers = #tpu.dot_dimension_numbers<[1], [0], [0], [1], [0, 0, 1, 1], [], []>} : vector<8x12xf32>, vector<12x32xf32>, vector<8x32xf32> -> vector<8x32xf32>
    %c0_3 = arith.constant 0 : index
    %c0_4 = arith.constant 0 : index
    %3 = vector.load %arg2[%c0_3, %c0_4] : memref<8x4xf32, #tpu.memory_space<vmem>>, vector<8x4xf32>
    %c0_5 = arith.constant 0 : index
    %c0_6 = arith.constant 0 : index
    %4 = vector.load %arg4[%c0_5, %c0_6] : memref<4x32xf32, #tpu.memory_space<vmem>>, vector<4x32xf32>
    %cst_7 = arith.constant dense<0.000000e+00> : vector<8x32xf32>
    %5 = tpu.matmul %3, %4, %cst_7 {dimension_numbers = #tpu.dot_dimension_numbers<[1], [0], [0], [1], [0, 0, 1, 1], [], []>} : vector<8x4xf32>, vector<4x32xf32>, vector<8x32xf32> -> vector<8x32xf32>
    %6 = arith.addf %2, %5 : vector<8x32xf32>
    %c0_8 = arith.constant 0 : index
    %c0_9 = arith.constant 0 : index
    %7 = vector.load %arg5[%c0_8, %c0_9] : memref<1x32xf32, #tpu.memory_space<vmem>>, vector<1x32xf32>
    %8 = vector.broadcast %7 : vector<1x32xf32> to vector<8x32xf32>
    %9 = arith.addf %6, %8 : vector<8x32xf32>
    %cst_10 = arith.constant 0.000000e+00 : f32
    %10 = vector.broadcast %cst_10 : f32 to vector<8x32xf32>
    %11 = arith.maximumf %9, %10 : vector<8x32xf32>
    %c0_11 = arith.constant 0 : index
    %c0_12 = arith.constant 0 : index
    %12 = vector.load %arg6[%c0_11, %c0_12] : memref<32x32xf32, #tpu.memory_space<vmem>>, vector<32x32xf32>
    %cst_13 = arith.constant dense<0.000000e+00> : vector<8x32xf32>
    %13 = tpu.matmul %11, %12, %cst_13 {dimension_numbers = #tpu.dot_dimension_numbers<[1], [0], [0], [1], [0, 0, 1, 1], [], []>} : vector<8x32xf32>, vector<32x32xf32>, vector<8x32xf32> -> vector<8x32xf32>
    %c0_14 = arith.constant 0 : index
    %c0_15 = arith.constant 0 : index
    %14 = vector.load %arg7[%c0_14, %c0_15] : memref<1x32xf32, #tpu.memory_space<vmem>>, vector<1x32xf32>
    %15 = vector.broadcast %14 : vector<1x32xf32> to vector<8x32xf32>
    %16 = arith.addf %13, %15 : vector<8x32xf32>
    %cst_16 = arith.constant 0.000000e+00 : f32
    %17 = vector.broadcast %cst_16 : f32 to vector<8x32xf32>
    %18 = arith.maximumf %16, %17 : vector<8x32xf32>
    %c0_17 = arith.constant 0 : index
    %c0_18 = arith.constant 0 : index
    %19 = vector.load %arg8[%c0_17, %c0_18] : memref<32x32xf32, #tpu.memory_space<vmem>>, vector<32x32xf32>
    %cst_19 = arith.constant dense<0.000000e+00> : vector<8x32xf32>
    %20 = tpu.matmul %18, %19, %cst_19 {dimension_numbers = #tpu.dot_dimension_numbers<[1], [0], [0], [1], [0, 0, 1, 1], [], []>} : vector<8x32xf32>, vector<32x32xf32>, vector<8x32xf32> -> vector<8x32xf32>
    %c0_20 = arith.constant 0 : index
    %c0_21 = arith.constant 0 : index
    %21 = vector.load %arg9[%c0_20, %c0_21] : memref<1x32xf32, #tpu.memory_space<vmem>>, vector<1x32xf32>
    %22 = vector.broadcast %21 : vector<1x32xf32> to vector<8x32xf32>
    %23 = arith.addf %20, %22 : vector<8x32xf32>
    %cst_22 = arith.constant 0.000000e+00 : f32
    %24 = vector.broadcast %cst_22 : f32 to vector<8x32xf32>
    %25 = arith.maximumf %23, %24 : vector<8x32xf32>
    %c0_23 = arith.constant 0 : index
    %c0_24 = arith.constant 0 : index
    %26 = vector.load %arg10[%c0_23, %c0_24] : memref<32x1xf32, #tpu.memory_space<vmem>>, vector<32x1xf32>
    %cst_25 = arith.constant dense<0.000000e+00> : vector<8x1xf32>
    %27 = tpu.matmul %25, %26, %cst_25 {dimension_numbers = #tpu.dot_dimension_numbers<[1], [0], [0], [1], [0, 0, 1, 1], [], []>} : vector<8x32xf32>, vector<32x1xf32>, vector<8x1xf32> -> vector<8x1xf32>
    %c0_26 = arith.constant 0 : index
    %c0_27 = arith.constant 0 : index
    %28 = memref.load %arg11[%c0_26, %c0_27] : memref<1x1xf32, #tpu.memory_space<smem>>
    %29 = vector.broadcast %28 : f32 to vector<8x1xf32>
    %30 = arith.addf %27, %29 : vector<8x1xf32>
    %c0_28 = arith.constant 0 : index
    %c0_29 = arith.constant 0 : index
    %31 = vector.load %arg12[%c0_28, %c0_29] : memref<8x1xf32, #tpu.memory_space<vmem>>, vector<8x1xf32>
    tpu.vector_store %arg12[%c0_28, %c0_29], %30 {strides = array<i32>} : memref<8x1xf32, #tpu.memory_space<vmem>>, vector<8x1xf32>,
    return
  }
  func.func @transform_0(%arg0: i32) -> (i32, i32) {
    %c0_i32 = arith.constant 0 : i32
    %c0_i32_0 = arith.constant 0 : i32
    return %arg0, %c0_i32 : i32, i32
  }
  func.func @transform_1(%arg0: i32) -> (i32, i32) {
    %c0_i32 = arith.constant 0 : i32
    %c0_i32_0 = arith.constant 0 : i32
    return %arg0, %c0_i32 : i32, i32
  }
  func.func @transform_2(%arg0: i32) -> (i32, i32) {
    %c0_i32 = arith.constant 0 : i32
    %c0_i32_0 = arith.constant 0 : i32
    %c0_i32_1 = arith.constant 0 : i32
    return %c0_i32, %c0_i32_0 : i32, i32
  }
  func.func @transform_3(%arg0: i32) -> (i32, i32) {
    %c0_i32 = arith.constant 0 : i32
    %c0_i32_0 = arith.constant 0 : i32
    %c0_i32_1 = arith.constant 0 : i32
    return %c0_i32, %c0_i32_0 : i32, i32
  }
  func.func @transform_4(%arg0: i32) -> (i32, i32) {
    %c0_i32 = arith.constant 0 : i32
    %c0_i32_0 = arith.constant 0 : i32
    %c0_i32_1 = arith.constant 0 : i32
    return %c0_i32, %c0_i32_0 : i32, i32
  }
  func.func @transform_5(%arg0: i32) -> (i32, i32) {
    %c0_i32 = arith.constant 0 : i32
    %c0_i32_0 = arith.constant 0 : i32
    %c0_i32_1 = arith.constant 0 : i32
    return %c0_i32, %c0_i32_0 : i32, i32
  }
  func.func @transform_6(%arg0: i32) -> (i32, i32) {
    %c0_i32 = arith.constant 0 : i32
    %c0_i32_0 = arith.constant 0 : i32
    %c0_i32_1 = arith.constant 0 : i32
    return %c0_i32, %c0_i32_0 : i32, i32
  }
  func.func @transform_7(%arg0: i32) -> (i32, i32) {
    %c0_i32 = arith.constant 0 : i32
    %c0_i32_0 = arith.constant 0 : i32
    %c0_i32_1 = arith.constant 0 : i32
    return %c0_i32, %c0_i32_0 : i32, i32
  }
  func.func @transform_8(%arg0: i32) -> (i32, i32) {
    %c0_i32 = arith.constant 0 : i32
    %c0_i32_0 = arith.constant 0 : i32
    %c0_i32_1 = arith.constant 0 : i32
    return %c0_i32, %c0_i32_0 : i32, i32
  }
  func.func @transform_9(%arg0: i32) -> (i32, i32) {
    %c0_i32 = arith.constant 0 : i32
    %c0_i32_0 = arith.constant 0 : i32
    %c0_i32_1 = arith.constant 0 : i32
    return %c0_i32, %c0_i32_0 : i32, i32
  }
  func.func @transform_10(%arg0: i32) -> (i32, i32) {
    %c0_i32 = arith.constant 0 : i32
    %c0_i32_0 = arith.constant 0 : i32
    %c0_i32_1 = arith.constant 0 : i32
    return %c0_i32, %c0_i32_0 : i32, i32
  }
  func.func @transform_11(%arg0: i32) -> (i32, i32) {
    %c0_i32 = arith.constant 0 : i32
    %c0_i32_0 = arith.constant 0 : i32
    return %arg0, %c0_i32 : i32, i32
  }
}

</mosaic_0001>

<llo_original>
// kernel: tpu_custom_call.1
$region0: #{tpu_custom_call.1}
  #allocation0 [shape = 'u32[]', space=smem, size = 0x4, offset = 0x4, fixed_abs, tag = 'smem constant byte address 0x4 - core index']
  #allocation1 [shape = 'u32[144,128]{1,0:T(1,128)}', space=vmem, size = 0x12000, scoped, tag = 'internal scratch']
  #allocation2 [shape = 'f32[1,1]{1,0:T(1,128)S(6)}', space=smem, size = 0x200, scoped, tag = 'scoped memory for tpu_custom_call.1']
  %s0 = inlined_call_operand.hbm [shape: f32[8,12], index: 0, kind: input, shape index: {}]
  %s1 = inlined_call_operand.vmem [shape: f32[8,4], index: 1, kind: input, shape index: {}]
  %s2 = inlined_call_operand.hbm [shape: f32[12,32], index: 2, kind: input, shape index: {}]
  %s3 = inlined_call_operand.hbm [shape: f32[4,32], index: 3, kind: input, shape index: {}]
  %s4 = inlined_call_operand.vmem [shape: f32[1,32], index: 4, kind: input, shape index: {}]
  %s5 = inlined_call_operand.vmem [shape: f32[32,32], index: 5, kind: input, shape index: {}]
  %s6 = inlined_call_operand.vmem [shape: f32[1,32], index: 6, kind: input, shape index: {}]
  %s7 = inlined_call_operand.vmem [shape: f32[32,32], index: 7, kind: input, shape index: {}]
  %s8 = inlined_call_operand.vmem [shape: f32[1,32], index: 8, kind: input, shape index: {}]
  %s9 = inlined_call_operand.vmem [shape: f32[32,1], index: 9, kind: input, shape index: {}]
  %s10 = inlined_call_operand.<no memory space> [shape: f32[1,1], index: 10, kind: input, shape index: {}]
  %s11 = inlined_call_operand.vmem [shape: f32[8,1], index: 11, kind: output, shape index: {}]
  %s12 = sld [smem:[#allocation0]]
  $region66: #{tpu_custom_call.1} parent=0
    _
  %s14 = ssub.s32 1, %s12
  %s15 = scalar_select 0, %s14, %s12
  %16 = sst [smem:[#allocation2]] %s10
  $region1: #{tpu_custom_call.1} parent=0
    #allocation3 [shape = 'u8[4096]{0}', space=vmem, size = 0x1000, scoped, tag = 'input window, operand 0, single buffered']
    #allocation4 [shape = 's32[1]{0}', space=sflag, size = 0x4, scoped, tag = 'scoped memory for tpu_custom_call.1']
    #allocation5 [shape = 'u8[8192]{0}', space=vmem, size = 0x2000, scoped, tag = 'input window, operand 2, single buffered']
    #allocation6 [shape = 's32[1]{0}', space=sflag, size = 0x4, scoped, tag = 'scoped memory for tpu_custom_call.1']
    #allocation7 [shape = 'u8[2048]{0}', space=vmem, size = 0x800, scoped, tag = 'input window, operand 3, single buffered']
    %17 = vsyncpa [#allocation4], 0
    %18 = vsyncpa [#allocation6], 0
    // Predicated region
    $region2: #{tpu_custom_call.1} parent=1 // pred_check
      _
    $region3: #{tpu_custom_call.1} parent=1 // pred_check_branch
      %20 = sbr.rel (0) target = $region5
    $region4: #{tpu_custom_call.1} parent=1 // pred_region
      %s22 = ssub.s32 128, 128
      %23 = vsyncadd [#allocation4], %s22
      %s25 = sshll.u32 [#allocation3], 4
      %s26 = int_to_ptr.vmem [resolvable:$true] %s25
      %28 = dma.hbm_to_vmem [thread:$0]  %s0, 128, %s26, [#allocation4]
    $region5: #{tpu_custom_call.1} parent=1 // pred_fallthru
      _
    // Predicated region
    $region6: #{tpu_custom_call.1} parent=1 // pred_check
      _
    $region7: #{tpu_custom_call.1} parent=1 // pred_check_branch
      %30 = sbr.rel (0) target = $region9
    $region8: #{tpu_custom_call.1} parent=1 // pred_region
      _
    $region9: #{tpu_custom_call.1} parent=1 // pred_fallthru
      _
    // Predicated region
    $region10: #{tpu_custom_call.1} parent=1 // pred_check
      _
    $region11: #{tpu_custom_call.1} parent=1 // pred_check_branch
      %32 = sbr.rel (0) target = $region13
    $region12: #{tpu_custom_call.1} parent=1 // pred_region
      %s34 = ssub.s32 256, 256
      %35 = vsyncadd [#allocation6], %s34
      %s36 = sshll.u32 [#allocation5], 4
      %s37 = int_to_ptr.vmem [resolvable:$true] %s36
      %42 = dma.hbm_to_vmem [thread:$0]  %s2, 256, %s37, [#allocation6], 128, 128, 8
    $region13: #{tpu_custom_call.1} parent=1 // pred_fallthru
      _
    // Predicated region
    $region14: #{tpu_custom_call.1} parent=1 // pred_check
      _
    $region15: #{tpu_custom_call.1} parent=1 // pred_check_branch
      %44 = sbr.rel (0) target = $region17
    $region16: #{tpu_custom_call.1} parent=1 // pred_region
      %s46 = ssub.s32 64, 64
      %47 = vsyncadd [#allocation6], %s46
      %s49 = sshll.u32 [#allocation7], 4
      %s50 = int_to_ptr.vmem [resolvable:$true] %s49
      %52 = dma.hbm_to_vmem [thread:$0]  %s3, 64, %s50, [#allocation6]
    $region17: #{tpu_custom_call.1} parent=1 // pred_fallthru
      _
    // Predicated region
    $region18: #{tpu_custom_call.1} parent=1 // pred_check
      _
    $region19: #{tpu_custom_call.1} parent=1 // pred_check_branch
      %54 = sbr.rel (0) target = $region21
    $region20: #{tpu_custom_call.1} parent=1 // pred_region
      _
    $region21: #{tpu_custom_call.1} parent=1 // pred_fallthru
      _
    // Predicated region
    $region22: #{tpu_custom_call.1} parent=1 // pred_check
      _
    $region23: #{tpu_custom_call.1} parent=1 // pred_check_branch
      %56 = sbr.rel (0) target = $region25
    $region24: #{tpu_custom_call.1} parent=1 // pred_region
      _
    $region25: #{tpu_custom_call.1} parent=1 // pred_fallthru
      _
    // Predicated region
    $region26: #{tpu_custom_call.1} parent=1 // pred_check
      _
    $region27: #{tpu_custom_call.1} parent=1 // pred_check_branch
      %58 = sbr.rel (0) target = $region29
    $region28: #{tpu_custom_call.1} parent=1 // pred_region
      _
    $region29: #{tpu_custom_call.1} parent=1 // pred_fallthru
      _
    // Predicated region
    $region30: #{tpu_custom_call.1} parent=1 // pred_check
      _
    $region31: #{tpu_custom_call.1} parent=1 // pred_check_branch
      %60 = sbr.rel (0) target = $region33
    $region32: #{tpu_custom_call.1} parent=1 // pred_region
      _
    $region33: #{tpu_custom_call.1} parent=1 // pred_fallthru
      _
    // Predicated region
    $region34: #{tpu_custom_call.1} parent=1 // pred_check
      _
    $region35: #{tpu_custom_call.1} parent=1 // pred_check_branch
      %62 = sbr.rel (0) target = $region37
    $region36: #{tpu_custom_call.1} parent=1 // pred_region
      _
    $region37: #{tpu_custom_call.1} parent=1 // pred_fallthru
      _
    // Predicated region
    $region38: #{tpu_custom_call.1} parent=1 // pred_check
      _
    $region39: #{tpu_custom_call.1} parent=1 // pred_check_branch
      %64 = sbr.rel (0) target = $region41
    $region40: #{tpu_custom_call.1} parent=1 // pred_region
      _
    $region41: #{tpu_custom_call.1} parent=1 // pred_fallthru
      _
    // Predicated region
    $region42: #{tpu_custom_call.1} parent=1 // pred_check
      _
    $region43: #{tpu_custom_call.1} parent=1 // pred_check_branch
      %66 = sbr.rel (0) target = $region45
    $region44: #{tpu_custom_call.1} parent=1 // pred_region
      _
    $region45: #{tpu_custom_call.1} parent=1 // pred_fallthru
      _
    // Predicated region
    $region46: #{tpu_custom_call.1} parent=1 // pred_check
      _
    $region47: #{tpu_custom_call.1} parent=1 // pred_check_branch
      %68 = sbr.rel (0) target = $region49
    $region48: #{tpu_custom_call.1} parent=1 // pred_region
      %69 = dma.done [#allocation4], 128
    $region49: #{tpu_custom_call.1} parent=1 // pred_fallthru
      _
    // Predicated region
    $region50: #{tpu_custom_call.1} parent=1 // pred_check
      _
    $region51: #{tpu_custom_call.1} parent=1 // pred_check_branch
      %71 = sbr.rel (0) target = $region53
    $region52: #{tpu_custom_call.1} parent=1 // pred_region
      %72 = dma.done [#allocation6], 256
    $region53: #{tpu_custom_call.1} parent=1 // pred_fallthru
      _
    // Predicated region
    $region54: #{tpu_custom_call.1} parent=1 // pred_check
      _
    $region55: #{tpu_custom_call.1} parent=1 // pred_check_branch
      %74 = sbr.rel (0) target = $region57
    $region56: #{tpu_custom_call.1} parent=1 // pred_region
      %75 = dma.done [#allocation6], 64
    $region57: #{tpu_custom_call.1} parent=1 // pred_fallthru
      _
    %v76 = vld [vmem:[#allocation3] sm:$0xff]
    %v77 = vld [vmem:[#allocation5] sm:$0xff]
    %v78 = vld [vmem:[#allocation5 + $0x8] sm:$0xf]
    %v79 = vld [vmem:[%s1] sm:$0xff]
    %v80 = vld [vmem:[#allocation7] sm:$0xf]
    %vm81 = vcmask 31744
    %v83 = vsel %vm81, %v79, 0
    %vm85 = vcmask 1043456
    %v87 = vsel %vm85, %v80, 0
    %89 = vmatprep.subr.mxu0 0.0
    %90 = vmatpush1.msra.mxu0 %v87
    %91 = vmatprep.subr.mxu0 0.0
    %92 = vmatpush1.msra.mxu0 0.0
    %93 = vmatprep.subr.mxu0 0.0
    %94 = vmatpush1.msra.mxu0 0.0
    %95 = vmatprep.subr.mxu0 0.0
    %96 = vmatpush1.msra.mxu0 0.0
    %97 = vmatprep.subr.mxu0 0.0
    %98 = vmatpush1.msra.mxu0 0.0
    %99 = vmatprep.subr.mxu0 0.0
    %100 = vmatpush1.msra.mxu0 0.0
    %101 = vmatprep.subr.mxu0 0.0
    %102 = vmatpush1.msra.mxu0 0.0
    %103 = vmatprep.subr.mxu0 0.0
    %104 = vmatpush1.msra.mxu0 0.0
    %105 = vmatprep.subr.mxu0 0.0
    %106 = vmatpush1.msra.mxu0 0.0
    %107 = vmatprep.subr.mxu0 0.0
    %108 = vmatpush1.msra.mxu0 0.0
    %109 = vmatprep.subr.mxu0 0.0
    %110 = vmatpush1.msra.mxu0 0.0
    %111 = vmatprep.subr.mxu0 0.0
    %112 = vmatpush1.msra.mxu0 0.0
    %113 = vmatprep.subr.mxu0 0.0
    %114 = vmatpush1.msra.mxu0 0.0
    %115 = vmatprep.subr.mxu0 0.0
    %116 = vmatpush1.msra.mxu0 0.0
    %117 = vmatprep.subr.mxu0 0.0
    %118 = vmatpush1.msra.mxu0 0.0
    %119 = vmatprep.subr.mxu0 0.0
    %120 = vmatpush1.msra.mxu0 0.0
    %121 = vmatprep.subr.mxu0 0.0
    %122 = vmatpush1.msra.mxu0 0.0
    %123 = vmatprep.subr.mxu0 0.0
    %124 = vmatpush1.msra.mxu0 0.0
    %125 = vmatprep.subr.mxu0 0.0
    %126 = vmatpush1.msra.mxu0 0.0
    %127 = vmatprep.subr.mxu0 0.0
    %128 = vmatpush1.msra.mxu0 0.0
    %129 = vmatprep.subr.mxu0 0.0
    %130 = vmatpush1.msra.mxu0 0.0
    %131 = vmatprep.subr.mxu0 0.0
    %132 = vmatpush1.msra.mxu0 0.0
    %133 = vmatprep.subr.mxu0 0.0
    %134 = vmatpush1.msra.mxu0 0.0
    %135 = vmatprep.subr.mxu0 0.0
    %136 = vmatpush1.msra.mxu0 0.0
    %137 = vmatprep.subr.mxu0 0.0
    %138 = vmatpush1.msra.mxu0 0.0
    %139 = vmatprep.subr.mxu0 0.0
    %140 = vmatpush1.msra.mxu0 0.0
    %141 = vmatprep.subr.mxu0 0.0
    %142 = vmatpush1.msra.mxu0 0.0
    %143 = vmatprep.subr.mxu0 0.0
    %144 = vmatpush1.msra.mxu0 0.0
    %145 = vmatprep.subr.mxu0 0.0
    %146 = vmatpush1.msra.mxu0 0.0
    %147 = vmatprep.subr.mxu0 0.0
    %148 = vmatpush1.msra.mxu0 0.0
    %149 = vmatprep.subr.mxu0 0.0
    %150 = vmatpush1.msra.mxu0 0.0
    %151 = vmatprep.subr.mxu0 0.0
    %152 = vmatpush1.msra.mxu0 0.0
    %153 = vmatprep.mubr.f32.mxu0 0.0
    %154 = vmatmul.mubr.f32.gmra.mrb[0].mxu0 %v83
    %v155 = vpop.f32.mrb[0].mxu0
    %v156 = vadd.f32 0.0, %v155
    %v157 = vpop.f32.mrb[0].mxu0
    %158 = vdwg.mxu0
    %vm159 = vcmask 97280
    %v161 = vsel %vm159, %v76, 0
    %v164 = vsel %vm85, %v78, 0
    %166 = vmatprep.subr.mxu0 0.0
    %167 = vmatpush1.msra.mxu0 %v77
    %168 = vmatprep.subr.mxu0 0.0
    %169 = vmatpush1.msra.mxu0 %v164
    %170 = vmatprep.subr.mxu0 0.0
    %171 = vmatpush1.msra.mxu0 0.0
    %172 = vmatprep.subr.mxu0 0.0
    %173 = vmatpush1.msra.mxu0 0.0
    %174 = vmatprep.subr.mxu0 0.0
    %175 = vmatpush1.msra.mxu0 0.0
    %176 = vmatprep.subr.mxu0 0.0
    %177 = vmatpush1.msra.mxu0 0.0
    %178 = vmatprep.subr.mxu0 0.0
    %179 = vmatpush1.msra.mxu0 0.0
    %180 = vmatprep.subr.mxu0 0.0
    %181 = vmatpush1.msra.mxu0 0.0
    %182 = vmatprep.subr.mxu0 0.0
    %183 = vmatpush1.msra.mxu0 0.0
    %184 = vmatprep.subr.mxu0 0.0
    %185 = vmatpush1.msra.mxu0 0.0
    %186 = vmatprep.subr.mxu0 0.0
    %187 = vmatpush1.msra.mxu0 0.0
    %188 = vmatprep.subr.mxu0 0.0
    %189 = vmatpush1.msra.mxu0 0.0
    %190 = vmatprep.subr.mxu0 0.0
    %191 = vmatpush1.msra.mxu0 0.0
    %192 = vmatprep.subr.mxu0 0.0
    %193 = vmatpush1.msra.mxu0 0.0
    %194 = vmatprep.subr.mxu0 0.0
    %195 = vmatpush1.msra.mxu0 0.0
    %196 = vmatprep.subr.mxu0 0.0
    %197 = vmatpush1.msra.mxu0 0.0
    %198 = vmatprep.subr.mxu0 0.0
    %199 = vmatpush1.msra.mxu0 0.0
    %200 = vmatprep.subr.mxu0 0.0
    %201 = vmatpush1.msra.mxu0 0.0
    %202 = vmatprep.subr.mxu0 0.0
    %203 = vmatpush1.msra.mxu0 0.0
    %204 = vmatprep.subr.mxu0 0.0
    %205 = vmatpush1.msra.mxu0 0.0
    %206 = vmatprep.subr.mxu0 0.0
    %207 = vmatpush1.msra.mxu0 0.0
    %208 = vmatprep.subr.mxu0 0.0
    %209 = vmatpush1.msra.mxu0 0.0
    %210 = vmatprep.subr.mxu0 0.0
    %211 = vmatpush1.msra.mxu0 0.0
    %212 = vmatprep.subr.mxu0 0.0
    %213 = vmatpush1.msra.mxu0 0.0
    %214 = vmatprep.subr.mxu0 0.0
    %215 = vmatpush1.msra.mxu0 0.0
    %216 = vmatprep.subr.mxu0 0.0
    %217 = vmatpush1.msra.mxu0 0.0
    %218 = vmatprep.subr.mxu0 0.0
    %219 = vmatpush1.msra.mxu0 0.0
    %220 = vmatprep.subr.mxu0 0.0
    %221 = vmatpush1.msra.mxu0 0.0
    %222 = vmatprep.subr.mxu0 0.0
    %223 = vmatpush1.msra.mxu0 0.0
    %224 = vmatprep.subr.mxu0 0.0
    %225 = vmatpush1.msra.mxu0 0.0
    %226 = vmatprep.subr.mxu0 0.0
    %227 = vmatpush1.msra.mxu0 0.0
    %228 = vmatprep.subr.mxu0 0.0
    %229 = vmatpush1.msra.mxu0 0.0
    %230 = vmatprep.mubr.f32.mxu0 0.0
    %231 = vmatmul.mubr.f32.gmra.mrb[0].mxu0 %v161
    %v232 = vpop.f32.mrb[0].mxu0
    %v233 = vadd.f32 %v156, %v232
    %v234 = vpop.f32.mrb[0].mxu0
    %235 = vdwg.mxu0
    %v236 = vld [vmem:[%s4] sm:$0x1]
    %v238 = vlaneseq
    %v239 = vshrl.u32 %v238, 7
    %v240 = vsub.s32 0, %v239
    %v241 = vrot.slane %v236, %v240
    %v243 = vadd.f32 %v233, %v241
    %v244 = vmax.f32 %v243, 0.0
    %v245 = vld [vmem:[%s5] sm:$0xff]
    %v246 = vld [vmem:[%s5 + $0x8] sm:$0xff]
    %v247 = vld [vmem:[%s5 + $0x10] sm:$0xff]
    %v248 = vld [vmem:[%s5 + $0x18] sm:$0xff]
    %v249 = vld [vmem:[%s6] sm:$0x1]
    %v251 = vlaneseq
    %v252 = vshrl.u32 %v251, 7
    %v253 = vsub.s32 0, %v252
    %v254 = vrot.slane %v249, %v253
    %vm256 = vcmask 261120
    %v258 = vsel %vm256, %v244, 0
    %260 = vmatprep.subr.mxu0 0.0
    %261 = vmatpush1.msra.mxu0 %v245
    %262 = vmatprep.subr.mxu0 0.0
    %263 = vmatpush1.msra.mxu0 %v246
    %264 = vmatprep.subr.mxu0 0.0
    %265 = vmatpush1.msra.mxu0 %v247
    %266 = vmatprep.subr.mxu0 0.0
    %267 = vmatpush1.msra.mxu0 %v248
    %268 = vmatprep.subr.mxu0 0.0
    %269 = vmatpush1.msra.mxu0 0.0
    %270 = vmatprep.subr.mxu0 0.0
    %271 = vmatpush1.msra.mxu0 0.0
    %272 = vmatprep.subr.mxu0 0.0
    %273 = vmatpush1.msra.mxu0 0.0
    %274 = vmatprep.subr.mxu0 0.0
    %275 = vmatpush1.msra.mxu0 0.0
    %276 = vmatprep.subr.mxu0 0.0
    %277 = vmatpush1.msra.mxu0 0.0
    %278 = vmatprep.subr.mxu0 0.0
    %279 = vmatpush1.msra.mxu0 0.0
    %280 = vmatprep.subr.mxu0 0.0
    %281 = vmatpush1.msra.mxu0 0.0
    %282 = vmatprep.subr.mxu0 0.0
    %283 = vmatpush1.msra.mxu0 0.0
    %284 = vmatprep.subr.mxu0 0.0
    %285 = vmatpush1.msra.mxu0 0.0
    %286 = vmatprep.subr.mxu0 0.0
    %287 = vmatpush1.msra.mxu0 0.0
    %288 = vmatprep.subr.mxu0 0.0
    %289 = vmatpush1.msra.mxu0 0.0
    %290 = vmatprep.subr.mxu0 0.0
    %291 = vmatpush1.msra.mxu0 0.0
    %292 = vmatprep.subr.mxu0 0.0
    %293 = vmatpush1.msra.mxu0 0.0
    %294 = vmatprep.subr.mxu0 0.0
    %295 = vmatpush1.msra.mxu0 0.0
    %296 = vmatprep.subr.mxu0 0.0
    %297 = vmatpush1.msra.mxu0 0.0
    %298 = vmatprep.subr.mxu0 0.0
    %299 = vmatpush1.msra.mxu0 0.0
    %300 = vmatprep.subr.mxu0 0.0
    %301 = vmatpush1.msra.mxu0 0.0
    %302 = vmatprep.subr.mxu0 0.0
    %303 = vmatpush1.msra.mxu0 0.0
    %304 = vmatprep.subr.mxu0 0.0
    %305 = vmatpush1.msra.mxu0 0.0
    %306 = vmatprep.subr.mxu0 0.0
    %307 = vmatpush1.msra.mxu0 0.0
    %308 = vmatprep.subr.mxu0 0.0
    %309 = vmatpush1.msra.mxu0 0.0
    %310 = vmatprep.subr.mxu0 0.0
    %311 = vmatpush1.msra.mxu0 0.0
    %312 = vmatprep.subr.mxu0 0.0
    %313 = vmatpush1.msra.mxu0 0.0
    %314 = vmatprep.subr.mxu0 0.0
    %315 = vmatpush1.msra.mxu0 0.0
    %316 = vmatprep.subr.mxu0 0.0
    %317 = vmatpush1.msra.mxu0 0.0
    %318 = vmatprep.subr.mxu0 0.0
    %319 = vmatpush1.msra.mxu0 0.0
    %320 = vmatprep.subr.mxu0 0.0
    %321 = vmatpush1.msra.mxu0 0.0
    %322 = vmatprep.subr.mxu0 0.0
    %323 = vmatpush1.msra.mxu0 0.0
    %324 = vmatprep.mubr.f32.mxu0 0.0
    %325 = vmatmul.mubr.f32.gmra.mrb[0].mxu0 %v258
    %v326 = vpop.f32.mrb[0].mxu0
    %v327 = vadd.f32 %v254, %v326
    %v328 = vpop.f32.mrb[0].mxu0
    %329 = vdwg.mxu0
    %v330 = vmax.f32 %v327, 0.0
    %v331 = vld [vmem:[%s7] sm:$0xff]
    %v332 = vld [vmem:[%s7 + $0x8] sm:$0xff]
    %v333 = vld [vmem:[%s7 + $0x10] sm:$0xff]
    %v334 = vld [vmem:[%s7 + $0x18] sm:$0xff]
    %v335 = vld [vmem:[%s8] sm:$0x1]
    %v337 = vlaneseq
    %v338 = vshrl.u32 %v337, 7
    %v339 = vsub.s32 0, %v338
    %v340 = vrot.slane %v335, %v339
    %v343 = vsel %vm256, %v330, 0
    %345 = vmatprep.subr.mxu0 0.0
    %346 = vmatpush1.msra.mxu0 %v331
    %347 = vmatprep.subr.mxu0 0.0
    %348 = vmatpush1.msra.mxu0 %v332
    %349 = vmatprep.subr.mxu0 0.0
    %350 = vmatpush1.msra.mxu0 %v333
    %351 = vmatprep.subr.mxu0 0.0
    %352 = vmatpush1.msra.mxu0 %v334
    %353 = vmatprep.subr.mxu0 0.0
    %354 = vmatpush1.msra.mxu0 0.0
    %355 = vmatprep.subr.mxu0 0.0
    %356 = vmatpush1.msra.mxu0 0.0
    %357 = vmatprep.subr.mxu0 0.0
    %358 = vmatpush1.msra.mxu0 0.0
    %359 = vmatprep.subr.mxu0 0.0
    %360 = vmatpush1.msra.mxu0 0.0
    %361 = vmatprep.subr.mxu0 0.0
    %362 = vmatpush1.msra.mxu0 0.0
    %363 = vmatprep.subr.mxu0 0.0
    %364 = vmatpush1.msra.mxu0 0.0
    %365 = vmatprep.subr.mxu0 0.0
    %366 = vmatpush1.msra.mxu0 0.0
    %367 = vmatprep.subr.mxu0 0.0
    %368 = vmatpush1.msra.mxu0 0.0
    %369 = vmatprep.subr.mxu0 0.0
    %370 = vmatpush1.msra.mxu0 0.0
    %371 = vmatprep.subr.mxu0 0.0
    %372 = vmatpush1.msra.mxu0 0.0
    %373 = vmatprep.subr.mxu0 0.0
    %374 = vmatpush1.msra.mxu0 0.0
    %375 = vmatprep.subr.mxu0 0.0
    %376 = vmatpush1.msra.mxu0 0.0
    %377 = vmatprep.subr.mxu0 0.0
    %378 = vmatpush1.msra.mxu0 0.0
    %379 = vmatprep.subr.mxu0 0.0
    %380 = vmatpush1.msra.mxu0 0.0
    %381 = vmatprep.subr.mxu0 0.0
    %382 = vmatpush1.msra.mxu0 0.0
    %383 = vmatprep.subr.mxu0 0.0
    %384 = vmatpush1.msra.mxu0 0.0
    %385 = vmatprep.subr.mxu0 0.0
    %386 = vmatpush1.msra.mxu0 0.0
    %387 = vmatprep.subr.mxu0 0.0
    %388 = vmatpush1.msra.mxu0 0.0
    %389 = vmatprep.subr.mxu0 0.0
    %390 = vmatpush1.msra.mxu0 0.0
    %391 = vmatprep.subr.mxu0 0.0
    %392 = vmatpush1.msra.mxu0 0.0
    %393 = vmatprep.subr.mxu0 0.0
    %394 = vmatpush1.msra.mxu0 0.0
    %395 = vmatprep.subr.mxu0 0.0
    %396 = vmatpush1.msra.mxu0 0.0
    %397 = vmatprep.subr.mxu0 0.0
    %398 = vmatpush1.msra.mxu0 0.0
    %399 = vmatprep.subr.mxu0 0.0
    %400 = vmatpush1.msra.mxu0 0.0
    %401 = vmatprep.subr.mxu0 0.0
    %402 = vmatpush1.msra.mxu0 0.0
    %403 = vmatprep.subr.mxu0 0.0
    %404 = vmatpush1.msra.mxu0 0.0
    %405 = vmatprep.subr.mxu0 0.0
    %406 = vmatpush1.msra.mxu0 0.0
    %407 = vmatprep.subr.mxu0 0.0
    %408 = vmatpush1.msra.mxu0 0.0
    %409 = vmatprep.mubr.f32.mxu0 0.0
    %410 = vmatmul.mubr.f32.gmra.mrb[0].mxu0 %v343
    %v411 = vpop.f32.mrb[0].mxu0
    %v412 = vadd.f32 %v340, %v411
    %v413 = vpop.f32.mrb[0].mxu0
    %414 = vdwg.mxu0
    %v415 = vmax.f32 %v412, 0.0
    %v416 = vld [vmem:[%s9] sm:$0xff]
    %v417 = vld [vmem:[%s9 + $0x8] sm:$0xff]
    %v418 = vld [vmem:[%s9 + $0x10] sm:$0xff]
    %v419 = vld [vmem:[%s9 + $0x18] sm:$0xff]
    %s420 = sld [smem:[#allocation2]]
    %v421 = vstv %s420
    %v423 = vsel %vm256, %v415, 0
    %425 = vmatprep.subr.mxu0 0.0
    %426 = vmatpush1.msra.mxu0 %v416
    %427 = vmatprep.subr.mxu0 0.0
    %428 = vmatpush1.msra.mxu0 %v417
    %429 = vmatprep.subr.mxu0 0.0
    %430 = vmatpush1.msra.mxu0 %v418
    %431 = vmatprep.subr.mxu0 0.0
    %432 = vmatpush1.msra.mxu0 %v419
    %433 = vmatprep.subr.mxu0 0.0
    %434 = vmatpush1.msra.mxu0 0.0
    %435 = vmatprep.subr.mxu0 0.0
    %436 = vmatpush1.msra.mxu0 0.0
    %437 = vmatprep.subr.mxu0 0.0
    %438 = vmatpush1.msra.mxu0 0.0
    %439 = vmatprep.subr.mxu0 0.0
    %440 = vmatpush1.msra.mxu0 0.0
    %441 = vmatprep.subr.mxu0 0.0
    %442 = vmatpush1.msra.mxu0 0.0
    %443 = vmatprep.subr.mxu0 0.0
    %444 = vmatpush1.msra.mxu0 0.0
    %445 = vmatprep.subr.mxu0 0.0
    %446 = vmatpush1.msra.mxu0 0.0
    %447 = vmatprep.subr.mxu0 0.0
    %448 = vmatpush1.msra.mxu0 0.0
    %449 = vmatprep.subr.mxu0 0.0
    %450 = vmatpush1.msra.mxu0 0.0
    %451 = vmatprep.subr.mxu0 0.0
    %452 = vmatpush1.msra.mxu0 0.0
    %453 = vmatprep.subr.mxu0 0.0
    %454 = vmatpush1.msra.mxu0 0.0
    %455 = vmatprep.subr.mxu0 0.0
    %456 = vmatpush1.msra.mxu0 0.0
    %457 = vmatprep.subr.mxu0 0.0
    %458 = vmatpush1.msra.mxu0 0.0
    %459 = vmatprep.subr.mxu0 0.0
    %460 = vmatpush1.msra.mxu0 0.0
    %461 = vmatprep.subr.mxu0 0.0
    %462 = vmatpush1.msra.mxu0 0.0
    %463 = vmatprep.subr.mxu0 0.0
    %464 = vmatpush1.msra.mxu0 0.0
    %465 = vmatprep.subr.mxu0 0.0
    %466 = vmatpush1.msra.mxu0 0.0
    %467 = vmatprep.subr.mxu0 0.0
    %468 = vmatpush1.msra.mxu0 0.0
    %469 = vmatprep.subr.mxu0 0.0
    %470 = vmatpush1.msra.mxu0 0.0
    %471 = vmatprep.subr.mxu0 0.0
    %472 = vmatpush1.msra.mxu0 0.0
    %473 = vmatprep.subr.mxu0 0.0
    %474 = vmatpush1.msra.mxu0 0.0
    %475 = vmatprep.subr.mxu0 0.0
    %476 = vmatpush1.msra.mxu0 0.0
    %477 = vmatprep.subr.mxu0 0.0
    %478 = vmatpush1.msra.mxu0 0.0
    %479 = vmatprep.subr.mxu0 0.0
    %480 = vmatpush1.msra.mxu0 0.0
    %481 = vmatprep.subr.mxu0 0.0
    %482 = vmatpush1.msra.mxu0 0.0
    %483 = vmatprep.subr.mxu0 0.0
    %484 = vmatpush1.msra.mxu0 0.0
    %485 = vmatprep.subr.mxu0 0.0
    %486 = vmatpush1.msra.mxu0 0.0
    %487 = vmatprep.subr.mxu0 0.0
    %488 = vmatpush1.msra.mxu0 0.0
    %489 = vmatprep.mubr.f32.mxu0 0.0
    %490 = vmatmul.mubr.f32.gmra.mrb[0].mxu0 %v423
    %v491 = vpop.f32.mrb[0].mxu0
    %v492 = vadd.f32 %v421, %v491
    %v493 = vpop.f32.mrb[0].mxu0
    %494 = vdwg.mxu0
    %vm495 = vcmask 7168
    %496 = vst.msk [vmem:[%s11] sm:$0xff] %vm495, %v492
    // Predicated region
    $region58: #{tpu_custom_call.1} parent=1 // pred_check
      _
    $region59: #{tpu_custom_call.1} parent=1 // pred_check_branch
      %498 = sbr.rel (0) target = $region61
    $region60: #{tpu_custom_call.1} parent=1 // pred_region
      _
    $region61: #{tpu_custom_call.1} parent=1 // pred_fallthru
      _
    // Predicated region
    $region62: #{tpu_custom_call.1} parent=1 // pred_check
      _
    $region63: #{tpu_custom_call.1} parent=1 // pred_check_branch
      %500 = sbr.rel (0) target = $region65
    $region64: #{tpu_custom_call.1} parent=1 // pred_region
      _
    $region65: #{tpu_custom_call.1} parent=1 // pred_fallthru
      _
    %501 = vsyncpa [#allocation4], 1
    %502 = vsyncpa [#allocation6], 1

</llo_original>
